<compile_context>
chip_gen: v5e
topology: v5e:2x2
jax: 0.10.0
libtpu: 0.0.40
codegen_flags: <defaults>
</compile_context>

<pallas_src>
import functools

import jax
import jax.numpy as jnp
from jax import lax
from jax.experimental import pallas as pl
from jax.experimental.pallas import tpu as pltpu


def _round_up(x, m):
    return (x + m - 1) // m * m


def _gradient_loss_kernel(pred_ref, gt_ref, part_ref,
                          dot_acc, pn_acc, gn_acc, sse_acc, cp_ref, cg_ref,
                          *, b_valid, t_valid, num_t_blocks):
    # pred_ref / gt_ref: (tile_b, tile_t) blocks in the input dtype.
    # part_ref: (1, 8, 128) lane-dense per-row-block partial-sum tile.
    # scratch: per-row f32 accumulators + last-column carries.
    i = pl.program_id(0)          # row-block index  ("parallel")
    j = pl.program_id(1)          # time-block index ("arbitrary", innermost)
    tb, tt = pred_ref.shape
    f32 = jnp.float32

    @pl.when(j == 0)
    def _init():
        z = jnp.zeros((tb, 1), f32)
        dot_acc[...] = z
        pn_acc[...] = z
        gn_acc[...] = z
        sse_acc[...] = z
        cp_ref[...] = z
        cg_ref[...] = z

    p = pred_ref[...].astype(f32)
    g = gt_ref[...].astype(f32)

    # Global row / column ids: tail blocks may be partial, so mask and
    # sanitize (OOB block contents are unspecified and may be NaN).
    row_ids = lax.broadcasted_iota(jnp.int32, (tb, 1), 0) + i * tb
    row_valid = row_ids < b_valid                       # (tb, 1) bool
    col_ids = lax.broadcasted_iota(jnp.int32, (tb, tt), 1) + j * tt
    elem_valid = row_valid & (col_ids < t_valid)
    p = jnp.where(elem_valid, p, f32(0.0))
    g = jnp.where(elem_valid, g, f32(0.0))

    # ---- MSE partial: sum of squared error (padding contributes 0) --------
    d = p - g
    sse_acc[...] += jnp.sum(d * d, axis=1, keepdims=True)

    # ---- torch.diff(dim=1) partials ---------------------------------------
    # Diffs internal to this time block: global index j*tt + k, k in [0, tt-2].
    if tt > 1:
        pd = p[:, 1:] - p[:, :-1]
        gd = g[:, 1:] - g[:, :-1]
        dcols = lax.broadcasted_iota(jnp.int32, (tb, tt - 1), 1) + j * tt
        dmask = (row_valid & (dcols < (t_valid - 1))).astype(f32)
        pd = pd * dmask
        gd = gd * dmask
        dot_acc[...] += jnp.sum(pd * gd, axis=1, keepdims=True)
        pn_acc[...] += jnp.sum(pd * pd, axis=1, keepdims=True)
        gn_acc[...] += jnp.sum(gd * gd, axis=1, keepdims=True)

    # Boundary diff between the previous and current time block, via the
    # carried last column.  Global diff index is j*tt - 1 (only for j > 0).
    if num_t_blocks > 1:
        bmask = ((j > 0) & ((j * tt) < t_valid) & row_valid).astype(f32)
        bpd = (p[:, 0:1] - cp_ref[...]) * bmask
        bgd = (g[:, 0:1] - cg_ref[...]) * bmask
        dot_acc[...] += bpd * bgd
        pn_acc[...] += bpd * bpd
        gn_acc[...] += bgd * bgd
        cp_ref[...] = p[:, tt - 1:tt]
        cg_ref[...] = g[:, tt - 1:tt]

    # ---- Finalize: per-row cosine, lane-dense partial-sum tile ------------
    @pl.when(j == num_t_blocks - 1)
    def _finalize():
        eps = f32(1e-8)
        # torch.cosine_similarity clamps EACH norm to eps (not the product).
        denom = (jnp.maximum(jnp.sqrt(pn_acc[...]), eps)
                 * jnp.maximum(jnp.sqrt(gn_acc[...]), eps))
        cos = dot_acc[...] / denom
        rv = row_valid.astype(f32)
        # Padded / OOB rows would otherwise contribute (1 - 0) = 1.
        slope = jnp.sum((f32(1.0) - cos) * rv)
        sse = jnp.sum(sse_acc[...])
        sub = lax.broadcasted_iota(jnp.int32, (8, 128), 0)
        lane = lax.broadcasted_iota(jnp.int32, (8, 128), 1)
        tile = jnp.where((sub == 0) & (lane == 0), sse,
                         jnp.where((sub == 0) & (lane == 1), slope, f32(0.0)))
        part_ref[0] = tile


def _choose_tiles(B, T, itemsize, block_bytes):
    """Pick (tile_b, tile_t) obeying the (8/16, 128 | full-dim) layout rules."""
    row_align = 8 if itemsize >= 4 else (16 if itemsize == 2 else 32)
    tile_b_min = B if B <= row_align else row_align

    if tile_b_min * T * itemsize <= block_bytes:
        # Full-T blocks (a block dim equal to the array dim waives the 128 rule).
        tile_t = T
        if B <= row_align:
            tile_b = B
        else:
            rows_fit = max(row_align,
                           (block_bytes // (T * itemsize)) // row_align * row_align)
            tile_b = min(_round_up(B, row_align), rows_fit)
            if tile_b >= B:
                # Split rows so the "parallel" axis feeds both v7x TensorCores.
                tile_b = _round_up(-(-B // 2), row_align)
    else:
        # Long-T fallback (keeps blocks small on v7x's 64 MiB VMEM): minimal
        # rows, tile the time axis in multiples of 128; torch.diff across the
        # block boundary is handled by the in-kernel per-row carry.
        tile_b = tile_b_min
        lanes_fit = max(128,
                        (block_bytes // (tile_b * itemsize)) // 128 * 128)
        tile_t = min(_round_up(T, 128), lanes_fit)
    return tile_b, tile_t


def _reductions(pred, gt, *, block_bytes=2 * 1024 * 1024):
    """Return (sum_squared_error, sum(1 - cosine)) via the Pallas kernel."""
    assert pred.shape == gt.shape and pred.ndim == 2
    B, T = pred.shape
    itemsize = jnp.dtype(pred.dtype).itemsize
    tile_b, tile_t = _choose_tiles(B, T, itemsize, block_bytes)
    nb = -(-B // tile_b)
    nt = -(-T // tile_t)

    kernel = functools.partial(
        _gradient_loss_kernel, b_valid=B, t_valid=T, num_t_blocks=nt)

    parts = pl.pallas_call(
        kernel,
        out_shape=jax.ShapeDtypeStruct((nb, 8, 128), jnp.float32),
        grid=(nb, nt),
        in_specs=[
            pl.BlockSpec((tile_b, tile_t), lambda i, j: (i, j)),
            pl.BlockSpec((tile_b, tile_t), lambda i, j: (i, j)),
        ],
        out_specs=pl.BlockSpec((1, 8, 128), lambda i, j: (i, 0, 0)),
        scratch_shapes=[pltpu.VMEM((tile_b, 1), jnp.float32)] * 6,
        compiler_params=pltpu.CompilerParams(
            dimension_semantics=("parallel", "arbitrary"),
            vmem_limit_bytes=32 * 1024 * 1024,
        ),
        cost_estimate=pl.CostEstimate(
            flops=12 * B * T,
            transcendentals=2 * B,
            bytes_accessed=2 * B * T * itemsize + nb * 8 * 128 * 4,
        ),
    )(pred, gt)

    sse = jnp.sum(parts[:, 0, 0])
    slope_sum = jnp.sum(parts[:, 0, 1])
    return sse, slope_sum


class GradientLoss:
    """JAX/Pallas re-implementation of the PyTorch `gradientLoss` module."""

    def __init__(self, N, mse_lambda=0.8, gradient_lambda=0.2):
        self.N = N
        self.mse_lambda = mse_lambda
        self.gradient_lambda = gradient_lambda

    def __call__(self, pred, gt, epoch):
        B, T = pred.shape
        # TODO(synk): T == 1 makes torch.diff empty; kernel yields slope 1/row
        # (same as torch's eps-clamped cosine on zero vectors).
        sse, slope_sum = _reductions(pred, gt)

        mse = (sse / (B * T)) / (self.N * 2)   # F.mse_loss (mean) / (N*2)
        slope_loss = slope_sum / B             # mean over rows of (1 - cos)

        # epoch is a Python int -> schedule logic stays in Python.
        if epoch == 0:
            return self.mse_lambda * mse + self.gradient_lambda * slope_loss
        decay = 0.1 ** (epoch // 10)
        lamd_slope = self.gradient_lambda * decay
        norm = self.mse_lambda + lamd_slope
        return (self.mse_lambda / norm) * mse + (lamd_slope / norm) * slope_loss


def _reference(pred, gt, epoch, N, mse_lambda=0.8, gradient_lambda=0.2):
    # Pure-JAX reference matching the PyTorch module (per-norm eps clamp).
    mse = jnp.mean((pred - gt) ** 2) / (N * 2)
    pd = jnp.diff(pred, axis=1)
    gd = jnp.diff(gt, axis=1)
    dot = jnp.sum(pd * gd, axis=1)
    denom = (jnp.maximum(jnp.linalg.norm(pd, axis=1), 1e-8)
             * jnp.maximum(jnp.linalg.norm(gd, axis=1), 1e-8))
    slope_loss = jnp.mean(1.0 - dot / denom)
    if epoch == 0:
        return mse_lambda * mse + gradient_lambda * slope_loss
    decay = 0.1 ** (epoch // 10)
    lamd_slope = gradient_lambda * decay
    norm = mse_lambda + lamd_slope
    return (mse_lambda / norm) * mse + (lamd_slope / norm) * slope_loss


if __name__ == "__main__":
    key = jax.random.PRNGKey(0)
    N = 4
    loss_fn = GradientLoss(N=N, mse_lambda=0.8, gradient_lambda=0.2)

    # f32: one aligned shape, one exercising row-tail / lane-masked shapes.
    for (B, T) in ((8, 32), (20, 100)):
        k1, k2 = jax.random.split(jax.random.fold_in(key, B * 1000 + T))
        pred = jax.random.normal(k1, (B, T), dtype=jnp.float32)
        gt = jax.random.normal(k2, (B, T), dtype=jnp.float32)
        for epoch in (0, 5, 23):
            out = jax.block_until_ready(loss_fn(pred, gt, epoch))
            ref = jax.block_until_ready(_reference(pred, gt, epoch, N))
            assert jnp.allclose(out, ref, rtol=1e-4, atol=1e-5), (
                B, T, epoch, out, ref)

    # bf16 inputs: halves HBM reads; kernel accumulates in f32.
    k1, k2 = jax.random.split(jax.random.fold_in(key, 7))
    pred_bf = jax.random.normal(k1, (16, 96), jnp.float32).astype(jnp.bfloat16)
    gt_bf = jax.random.normal(k2, (16, 96), jnp.float32).astype(jnp.bfloat16)
    out = jax.block_until_ready(loss_fn(pred_bf, gt_bf, 3))
    ref = jax.block_until_ready(
        _reference(pred_bf.astype(jnp.float32), gt_bf.astype(jnp.float32), 3, N))
    assert jnp.allclose(out, ref, rtol=1e-4, atol=1e-4), (out, ref)

    # Force the long-T (time-tiled, per-row carry) path with a tiny per-block
    # budget and check the raw partial sums against the reference.
    k1, k2 = jax.random.split(jax.random.fold_in(key, 11))
    pred = jax.random.normal(k1, (20, 300), dtype=jnp.float32)
    gt = jax.random.normal(k2, (20, 300), dtype=jnp.float32)
    sse, slope_sum = jax.block_until_ready(
        _reductions(pred, gt, block_bytes=8 * 1024))
    pd = jnp.diff(pred, axis=1)
    gd = jnp.diff(gt, axis=1)
    denom = (jnp.maximum(jnp.linalg.norm(pd, axis=1), 1e-8)
             * jnp.maximum(jnp.linalg.norm(gd, axis=1), 1e-8))
    slope_ref = jnp.sum(1.0 - jnp.sum(pd * gd, axis=1) / denom)
    sse_ref = jnp.sum((pred - gt) ** 2)
    assert jnp.allclose(sse, sse_ref, rtol=1e-4), (sse, sse_ref)
    assert jnp.allclose(slope_sum, slope_ref, rtol=1e-4, atol=1e-4), (
        slope_sum, slope_ref)

    print("KERNEL_OK")
</pallas_src>

<mosaic_0001>
module attributes {stable_mosaic.version = 11 : i64} {
  func.func @_gradient_loss_kernel(%arg0: i32, %arg1: i32, %arg2: memref<8x32xf32, #tpu.memory_space<vmem>>, %arg3: memref<8x32xf32, #tpu.memory_space<vmem>>, %arg4: memref<1x8x128xf32, #tpu.memory_space<vmem>>, %arg5: memref<8x1xf32, #tpu.memory_space<vmem>>, %arg6: memref<8x1xf32, #tpu.memory_space<vmem>>, %arg7: memref<8x1xf32, #tpu.memory_space<vmem>>, %arg8: memref<8x1xf32, #tpu.memory_space<vmem>>, %arg9: memref<8x1xf32, #tpu.memory_space<vmem>>, %arg10: memref<8x1xf32, #tpu.memory_space<vmem>>) attributes {dimension_semantics = [#tpu.dimension_semantics<parallel>, #tpu.dimension_semantics<arbitrary>], iteration_bounds = array<i64: 1, 1>, scalar_prefetch = 0 : i64, scratch_operands = 6 : i64, tpu.core_type = #tpu.core_type<tc>, window_params = [{transform_indices = @transform_0, window_bounds = array<i64: 8, 32>}, {transform_indices = @transform_1, window_bounds = array<i64: 8, 32>}, {transform_indices = @transform_2, window_bounds = array<i64: 1, 8, 128>}]} {
    %c0_i32 = arith.constant 0 : i32
    %0 = arith.cmpi eq, %arg1, %c0_i32 : i32
    %1 = arith.extui %0 : i1 to i32
    %c0_i32_0 = arith.constant 0 : i32
    %2 = arith.cmpi ne, %1, %c0_i32_0 : i32
    scf.if %2 {
      %cst_30 = arith.constant 0.000000e+00 : f32
      %69 = vector.broadcast %cst_30 : f32 to vector<8x1xf32>
      %c0_31 = arith.constant 0 : index
      %c0_32 = arith.constant 0 : index
      %70 = vector.load %arg5[%c0_31, %c0_32] : memref<8x1xf32, #tpu.memory_space<vmem>>, vector<8x1xf32>
      tpu.vector_store %arg5[%c0_31, %c0_32], %69 {strides = array<i32>} : memref<8x1xf32, #tpu.memory_space<vmem>>, vector<8x1xf32>,
      %c0_33 = arith.constant 0 : index
      %c0_34 = arith.constant 0 : index
      %71 = vector.load %arg6[%c0_33, %c0_34] : memref<8x1xf32, #tpu.memory_space<vmem>>, vector<8x1xf32>
      tpu.vector_store %arg6[%c0_33, %c0_34], %69 {strides = array<i32>} : memref<8x1xf32, #tpu.memory_space<vmem>>, vector<8x1xf32>,
      %c0_35 = arith.constant 0 : index
      %c0_36 = arith.constant 0 : index
      %72 = vector.load %arg7[%c0_35, %c0_36] : memref<8x1xf32, #tpu.memory_space<vmem>>, vector<8x1xf32>
      tpu.vector_store %arg7[%c0_35, %c0_36], %69 {strides = array<i32>} : memref<8x1xf32, #tpu.memory_space<vmem>>, vector<8x1xf32>,
      %c0_37 = arith.constant 0 : index
      %c0_38 = arith.constant 0 : index
      %73 = vector.load %arg8[%c0_37, %c0_38] : memref<8x1xf32, #tpu.memory_space<vmem>>, vector<8x1xf32>
      tpu.vector_store %arg8[%c0_37, %c0_38], %69 {strides = array<i32>} : memref<8x1xf32, #tpu.memory_space<vmem>>, vector<8x1xf32>,
      %c0_39 = arith.constant 0 : index
      %c0_40 = arith.constant 0 : index
      %74 = vector.load %arg9[%c0_39, %c0_40] : memref<8x1xf32, #tpu.memory_space<vmem>>, vector<8x1xf32>
      tpu.vector_store %arg9[%c0_39, %c0_40], %69 {strides = array<i32>} : memref<8x1xf32, #tpu.memory_space<vmem>>, vector<8x1xf32>,
      %c0_41 = arith.constant 0 : index
      %c0_42 = arith.constant 0 : index
      %75 = vector.load %arg10[%c0_41, %c0_42] : memref<8x1xf32, #tpu.memory_space<vmem>>, vector<8x1xf32>
      tpu.vector_store %arg10[%c0_41, %c0_42], %69 {strides = array<i32>} : memref<8x1xf32, #tpu.memory_space<vmem>>, vector<8x1xf32>,
    } else {
    }
    %c0 = arith.constant 0 : index
    %c0_1 = arith.constant 0 : index
    %3 = vector.load %arg2[%c0, %c0_1] : memref<8x32xf32, #tpu.memory_space<vmem>>, vector<8x32xf32>
    %c0_2 = arith.constant 0 : index
    %c0_3 = arith.constant 0 : index
    %4 = vector.load %arg3[%c0_2, %c0_3] : memref<8x32xf32, #tpu.memory_space<vmem>>, vector<8x32xf32>
    %5 = tpu.iota {dimensions = array<i32: 0>} : vector<8x1xi32>
    %c8_i32 = arith.constant 8 : i32
    %6 = arith.muli %arg0, %c8_i32 : i32
    %7 = vector.broadcast %6 : i32 to vector<8x1xi32>
    %8 = arith.addi %5, %7 : vector<8x1xi32>
    %c8_i32_4 = arith.constant 8 : i32
    %9 = vector.broadcast %c8_i32_4 : i32 to vector<8x1xi32>
    %10 = arith.cmpi slt, %8, %9 : vector<8x1xi32>
    %11 = tpu.iota {dimensions = array<i32: 1>} : vector<8x32xi32>
    %c32_i32 = arith.constant 32 : i32
    %12 = arith.muli %arg1, %c32_i32 : i32
    %13 = vector.broadcast %12 : i32 to vector<8x32xi32>
    %14 = arith.addi %11, %13 : vector<8x32xi32>
    %c32_i32_5 = arith.constant 32 : i32
    %15 = vector.broadcast %c32_i32_5 : i32 to vector<8x32xi32>
    %16 = arith.cmpi slt, %14, %15 : vector<8x32xi32>
    %17 = vector.broadcast %10 : vector<8x1xi1> to vector<8x32xi1>
    %18 = arith.andi %17, %16 : vector<8x32xi1>
    %cst = arith.constant 0.000000e+00 : f32
    %19 = vector.broadcast %cst : f32 to vector<8x32xf32>
    %20 = arith.select %18, %3, %19 : vector<8x32xi1>, vector<8x32xf32>
    %cst_6 = arith.constant 0.000000e+00 : f32
    %21 = vector.broadcast %cst_6 : f32 to vector<8x32xf32>
    %22 = arith.select %18, %4, %21 : vector<8x32xi1>, vector<8x32xf32>
    %23 = arith.subf %20, %22 : vector<8x32xf32>
    %c0_7 = arith.constant 0 : index
    %c0_8 = arith.constant 0 : index
    %24 = vector.load %arg8[%c0_7, %c0_8] : memref<8x1xf32, #tpu.memory_space<vmem>>, vector<8x1xf32>
    %25 = arith.mulf %23, %23 : vector<8x32xf32>
    %cst_9 = arith.constant dense<0.000000e+00> : vector<8xf32>
    %26 = vector.multi_reduction <add>, %25, %cst_9 [1] : vector<8x32xf32> to vector<8xf32>
    %27 = vector.shape_cast %26 : vector<8xf32> to vector<8x1xf32>
    %28 = arith.addf %24, %27 : vector<8x1xf32>
    %c0_10 = arith.constant 0 : index
    %c0_11 = arith.constant 0 : index
    %29 = vector.load %arg8[%c0_10, %c0_11] : memref<8x1xf32, #tpu.memory_space<vmem>>, vector<8x1xf32>
    tpu.vector_store %arg8[%c0_10, %c0_11], %28 {strides = array<i32>} : memref<8x1xf32, #tpu.memory_space<vmem>>, vector<8x1xf32>,
    %30 = vector.extract_strided_slice %20 {offsets = [0, 1], sizes = [8, 31], strides = [1, 1]} : vector<8x32xf32> to vector<8x31xf32>
    %31 = vector.extract_strided_slice %20 {offsets = [0, 0], sizes = [8, 31], strides = [1, 1]} : vector<8x32xf32> to vector<8x31xf32>
    %32 = arith.subf %30, %31 : vector<8x31xf32>
    %33 = vector.extract_strided_slice %22 {offsets = [0, 1], sizes = [8, 31], strides = [1, 1]} : vector<8x32xf32> to vector<8x31xf32>
    %34 = vector.extract_strided_slice %22 {offsets = [0, 0], sizes = [8, 31], strides = [1, 1]} : vector<8x32xf32> to vector<8x31xf32>
    %35 = arith.subf %33, %34 : vector<8x31xf32>
    %36 = tpu.iota {dimensions = array<i32: 1>} : vector<8x31xi32>
    %c32_i32_12 = arith.constant 32 : i32
    %37 = arith.muli %arg1, %c32_i32_12 : i32
    %38 = vector.broadcast %37 : i32 to vector<8x31xi32>
    %39 = arith.addi %36, %38 : vector<8x31xi32>
    %c31_i32 = arith.constant 31 : i32
    %40 = vector.broadcast %c31_i32 : i32 to vector<8x31xi32>
    %41 = arith.cmpi slt, %39, %40 : vector<8x31xi32>
    %42 = vector.broadcast %10 : vector<8x1xi1> to vector<8x31xi1>
    %43 = arith.andi %42, %41 : vector<8x31xi1>
    %44 = arith.extui %43 : vector<8x31xi1> to vector<8x31xi32>
    %45 = arith.sitofp %44 : vector<8x31xi32> to vector<8x31xf32>
    %46 = arith.mulf %32, %45 : vector<8x31xf32>
    %47 = arith.mulf %35, %45 : vector<8x31xf32>
    %c0_13 = arith.constant 0 : index
    %c0_14 = arith.constant 0 : index
    %48 = vector.load %arg5[%c0_13, %c0_14] : memref<8x1xf32, #tpu.memory_space<vmem>>, vector<8x1xf32>
    %49 = arith.mulf %46, %47 : vector<8x31xf32>
    %cst_15 = arith.constant dense<0.000000e+00> : vector<8xf32>
    %50 = vector.multi_reduction <add>, %49, %cst_15 [1] : vector<8x31xf32> to vector<8xf32>
    %51 = vector.shape_cast %50 : vector<8xf32> to vector<8x1xf32>
    %52 = arith.addf %48, %51 : vector<8x1xf32>
    %c0_16 = arith.constant 0 : index
    %c0_17 = arith.constant 0 : index
    %53 = vector.load %arg5[%c0_16, %c0_17] : memref<8x1xf32, #tpu.memory_space<vmem>>, vector<8x1xf32>
    tpu.vector_store %arg5[%c0_16, %c0_17], %52 {strides = array<i32>} : memref<8x1xf32, #tpu.memory_space<vmem>>, vector<8x1xf32>,
    %c0_18 = arith.constant 0 : index
    %c0_19 = arith.constant 0 : index
    %54 = vector.load %arg6[%c0_18, %c0_19] : memref<8x1xf32, #tpu.memory_space<vmem>>, vector<8x1xf32>
    %55 = arith.mulf %46, %46 : vector<8x31xf32>
    %cst_20 = arith.constant dense<0.000000e+00> : vector<8xf32>
    %56 = vector.multi_reduction <add>, %55, %cst_20 [1] : vector<8x31xf32> to vector<8xf32>
    %57 = vector.shape_cast %56 : vector<8xf32> to vector<8x1xf32>
    %58 = arith.addf %54, %57 : vector<8x1xf32>
    %c0_21 = arith.constant 0 : index
    %c0_22 = arith.constant 0 : index
    %59 = vector.load %arg6[%c0_21, %c0_22] : memref<8x1xf32, #tpu.memory_space<vmem>>, vector<8x1xf32>
    tpu.vector_store %arg6[%c0_21, %c0_22], %58 {strides = array<i32>} : memref<8x1xf32, #tpu.memory_space<vmem>>, vector<8x1xf32>,
    %c0_23 = arith.constant 0 : index
    %c0_24 = arith.constant 0 : index
    %60 = vector.load %arg7[%c0_23, %c0_24] : memref<8x1xf32, #tpu.memory_space<vmem>>, vector<8x1xf32>
    %61 = arith.mulf %47, %47 : vector<8x31xf32>
    %cst_25 = arith.constant dense<0.000000e+00> : vector<8xf32>
    %62 = vector.multi_reduction <add>, %61, %cst_25 [1] : vector<8x31xf32> to vector<8xf32>
    %63 = vector.shape_cast %62 : vector<8xf32> to vector<8x1xf32>
    %64 = arith.addf %60, %63 : vector<8x1xf32>
    %c0_26 = arith.constant 0 : index
    %c0_27 = arith.constant 0 : index
    %65 = vector.load %arg7[%c0_26, %c0_27] : memref<8x1xf32, #tpu.memory_space<vmem>>, vector<8x1xf32>
    tpu.vector_store %arg7[%c0_26, %c0_27], %64 {strides = array<i32>} : memref<8x1xf32, #tpu.memory_space<vmem>>, vector<8x1xf32>,
    %c0_i32_28 = arith.constant 0 : i32
    %66 = arith.cmpi eq, %arg1, %c0_i32_28 : i32
    %67 = arith.extui %66 : i1 to i32
    %c0_i32_29 = arith.constant 0 : i32
    %68 = arith.cmpi ne, %67, %c0_i32_29 : i32
    scf.if %68 {
      %c0_30 = arith.constant 0 : index
      %c0_31 = arith.constant 0 : index
      %69 = vector.load %arg6[%c0_30, %c0_31] : memref<8x1xf32, #tpu.memory_space<vmem>>, vector<8x1xf32>
      %70 = math.sqrt %69 : vector<8x1xf32>
      %cst_32 = arith.constant 9.99999993E-9 : f32
      %71 = vector.broadcast %cst_32 : f32 to vector<8x1xf32>
      %72 = arith.maximumf %70, %71 : vector<8x1xf32>
      %c0_33 = arith.constant 0 : index
      %c0_34 = arith.constant 0 : index
      %73 = vector.load %arg7[%c0_33, %c0_34] : memref<8x1xf32, #tpu.memory_space<vmem>>, vector<8x1xf32>
      %74 = math.sqrt %73 : vector<8x1xf32>
      %cst_35 = arith.constant 9.99999993E-9 : f32
      %75 = vector.broadcast %cst_35 : f32 to vector<8x1xf32>
      %76 = arith.maximumf %74, %75 : vector<8x1xf32>
      %77 = arith.mulf %72, %76 : vector<8x1xf32>
      %c0_36 = arith.constant 0 : index
      %c0_37 = arith.constant 0 : index
      %78 = vector.load %arg5[%c0_36, %c0_37] : memref<8x1xf32, #tpu.memory_space<vmem>>, vector<8x1xf32>
      %79 = arith.divf %78, %77 : vector<8x1xf32>
      %80 = arith.extui %10 : vector<8x1xi1> to vector<8x1xi32>
      %81 = arith.sitofp %80 : vector<8x1xi32> to vector<8x1xf32>
      %cst_38 = arith.constant 1.000000e+00 : f32
      %82 = vector.broadcast %cst_38 : f32 to vector<8x1xf32>
      %83 = arith.subf %82, %79 : vector<8x1xf32>
      %84 = arith.mulf %83, %81 : vector<8x1xf32>
      %85 = vector.shape_cast %84 : vector<8x1xf32> to vector<1x8x1xf32>
      %cst_39 = arith.constant dense<0.000000e+00> : vector<1xf32>
      %86 = vector.multi_reduction <add>, %85, %cst_39 [1, 2] : vector<1x8x1xf32> to vector<1xf32>
      %87 = vector.shape_cast %86 : vector<1xf32> to vector<1x1x1xf32>
      %88 = vector.extract %87[0, 0, 0] : f32 from vector<1x1x1xf32>
      %c0_40 = arith.constant 0 : index
      %c0_41 = arith.constant 0 : index
      %89 = vector.load %arg8[%c0_40, %c0_41] : memref<8x1xf32, #tpu.memory_space<vmem>>, vector<8x1xf32>
      %90 = vector.shape_cast %89 : vector<8x1xf32> to vector<1x8x1xf32>
      %cst_42 = arith.constant dense<0.000000e+00> : vector<1xf32>
      %91 = vector.multi_reduction <add>, %90, %cst_42 [1, 2] : vector<1x8x1xf32> to vector<1xf32>
      %92 = vector.shape_cast %91 : vector<1xf32> to vector<1x1x1xf32>
      %93 = vector.extract %92[0, 0, 0] : f32 from vector<1x1x1xf32>
      %94 = tpu.iota {dimensions = array<i32: 0>} : vector<8x128xi32>
      %95 = tpu.iota {dimensions = array<i32: 1>} : vector<8x128xi32>
      %c0_i32_43 = arith.constant 0 : i32
      %96 = vector.broadcast %c0_i32_43 : i32 to vector<8x128xi32>
      %97 = arith.cmpi eq, %94, %96 : vector<8x128xi32>
      %c0_i32_44 = arith.constant 0 : i32
      %98 = vector.broadcast %c0_i32_44 : i32 to vector<8x128xi32>
      %99 = arith.cmpi eq, %95, %98 : vector<8x128xi32>
      %100 = arith.andi %97, %99 : vector<8x128xi1>
      %c0_i32_45 = arith.constant 0 : i32
      %101 = vector.broadcast %c0_i32_45 : i32 to vector<8x128xi32>
      %102 = arith.cmpi eq, %94, %101 : vector<8x128xi32>
      %c1_i32 = arith.constant 1 : i32
      %103 = vector.broadcast %c1_i32 : i32 to vector<8x128xi32>
      %104 = arith.cmpi eq, %95, %103 : vector<8x128xi32>
      %105 = arith.andi %102, %104 : vector<8x128xi1>
      %cst_46 = arith.constant 0.000000e+00 : f32
      %106 = vector.broadcast %88 : f32 to vector<8x128xf32>
      %107 = vector.broadcast %cst_46 : f32 to vector<8x128xf32>
      %108 = arith.select %105, %106, %107 : vector<8x128xi1>, vector<8x128xf32>
      %109 = vector.broadcast %93 : f32 to vector<8x128xf32>
      %110 = arith.select %100, %109, %108 : vector<8x128xi1>, vector<8x128xf32>
      %c0_47 = arith.constant 0 : index
      %c0_48 = arith.constant 0 : index
      %c0_49 = arith.constant 0 : index
      %111 = vector.load %arg4[%c0_47, %c0_48, %c0_49] : memref<1x8x128xf32, #tpu.memory_space<vmem>>, vector<1x8x128xf32>
      %112 = vector.shape_cast %111 : vector<1x8x128xf32> to vector<8x128xf32>
      %113 = vector.shape_cast %110 : vector<8x128xf32> to vector<1x8x128xf32>
      tpu.vector_store %arg4[%c0_47, %c0_48, %c0_49], %113 {strides = array<i32>} : memref<1x8x128xf32, #tpu.memory_space<vmem>>, vector<1x8x128xf32>,
    } else {
    }
    return
  }
  func.func @transform_0(%arg0: i32, %arg1: i32) -> (i32, i32) {
    %c0_i32 = arith.constant 0 : i32
    return %arg0, %arg1 : i32, i32
  }
  func.func @transform_1(%arg0: i32, %arg1: i32) -> (i32, i32) {
    %c0_i32 = arith.constant 0 : i32
    return %arg0, %arg1 : i32, i32
  }
  func.func @transform_2(%arg0: i32, %arg1: i32) -> (i32, i32, i32) {
    %c0_i32 = arith.constant 0 : i32
    %c0_i32_0 = arith.constant 0 : i32
    %c0_i32_1 = arith.constant 0 : i32
    return %arg0, %c0_i32, %c0_i32_0 : i32, i32, i32
  }
}

</mosaic_0001>

<llo_original>
// kernel: tpu_custom_call.1
$region0: #{tpu_custom_call.1}
  #allocation0 [shape = 'u32[]', space=smem, size = 0x4, offset = 0x4, fixed_abs, tag = 'smem constant byte address 0x4 - core index']
  #allocation1 [shape = 'u32[72,128]{1,0:T(1,128)}', space=vmem, size = 0x9000, scoped, tag = 'internal scratch']
  #allocation2 [shape = 'f32[8,1]{1,0:T(8,128)}', space=vmem, size = 0x1000, scoped, tag = 'scratch operand']
  #allocation3 [shape = 'f32[8,1]{1,0:T(8,128)}', space=vmem, size = 0x1000, scoped, tag = 'scratch operand']
  #allocation4 [shape = 'f32[8,1]{1,0:T(8,128)}', space=vmem, size = 0x1000, scoped, tag = 'scratch operand']
  #allocation5 [shape = 'f32[8,1]{1,0:T(8,128)}', space=vmem, size = 0x1000, scoped, tag = 'scratch operand']
  #allocation6 [shape = 'f32[8,1]{1,0:T(8,128)}', space=vmem, size = 0x1000, scoped, tag = 'scratch operand']
  #allocation7 [shape = 'f32[8,1]{1,0:T(8,128)}', space=vmem, size = 0x1000, scoped, tag = 'scratch operand']
  %s0 = inlined_call_operand.hbm [shape: f32[8,32], index: 0, kind: input, shape index: {}]
  %s1 = inlined_call_operand.hbm [shape: f32[8,32], index: 1, kind: input, shape index: {}]
  %s2 = inlined_call_operand.hbm [shape: f32[1,8,128], index: 2, kind: output, shape index: {}]
  %s3 = sld [smem:[#allocation0]]
  $region34: #{tpu_custom_call.1} parent=0
    _
  %s5 = ssub.s32 1, %s3
  %s6 = scalar_select 0, %s5, %s3
  $region1: #{tpu_custom_call.1} parent=0
    #allocation8 [shape = 'u8[4096]{0}', space=vmem, size = 0x1000, scoped, tag = 'input window, operand 0, single buffered']
    #allocation9 [shape = 's32[1]{0}', space=sflag, size = 0x4, scoped, tag = 'scoped memory for tpu_custom_call.1']
    #allocation10 [shape = 's32[1]{0}', space=sflag, size = 0x4, scoped, tag = 'scoped memory for tpu_custom_call.1']
    #allocation11 [shape = 'u8[4096]{0}', space=vmem, size = 0x1000, scoped, tag = 'input window, operand 1, single buffered']
    #allocation12 [shape = 's32[1]{0}', space=sflag, size = 0x4, scoped, tag = 'scoped memory for tpu_custom_call.1']
    #allocation13 [shape = 'u8[4096]{0}', space=vmem, size = 0x1000, scoped, tag = 'output window, operand 0, single buffered']
    %7 = vsyncpa [#allocation9], 0
    %8 = vsyncpa [#allocation12], 0
    %9 = vsyncpa [#allocation10], 0
    // Predicated region
    $region2: #{tpu_custom_call.1} parent=1 // pred_check
      _
    $region3: #{tpu_custom_call.1} parent=1 // pred_check_branch
      %11 = sbr.rel (0) target = $region5
    $region4: #{tpu_custom_call.1} parent=1 // pred_region
      %13 = vsyncadd [#allocation9], 0
      %s15 = sshll.u32 %s0, 4
      %s16 = int_to_ptr.hbm [resolvable:$true] %s15
      %s17 = sshll.u32 [#allocation8], 4
      %s18 = int_to_ptr.vmem [resolvable:$true] %s17
      %20 = dma.hbm_to_vmem [thread:$0]  %s16, 128, %s18, [#allocation9]
    $region5: #{tpu_custom_call.1} parent=1 // pred_fallthru
      _
    // Predicated region
    $region6: #{tpu_custom_call.1} parent=1 // pred_check
      _
    $region7: #{tpu_custom_call.1} parent=1 // pred_check_branch
      %22 = sbr.rel (0) target = $region9
    $region8: #{tpu_custom_call.1} parent=1 // pred_region
      %24 = vsyncadd [#allocation12], 0
      %s26 = sshll.u32 %s1, 4
      %s27 = int_to_ptr.hbm [resolvable:$true] %s26
      %s28 = sshll.u32 [#allocation11], 4
      %s29 = int_to_ptr.vmem [resolvable:$true] %s28
      %31 = dma.hbm_to_vmem [thread:$0]  %s27, 128, %s29, [#allocation12]
    $region9: #{tpu_custom_call.1} parent=1 // pred_fallthru
      _
    // Predicated region
    $region10: #{tpu_custom_call.1} parent=1 // pred_check
      _
    $region11: #{tpu_custom_call.1} parent=1 // pred_check_branch
      %33 = sbr.rel (0) target = $region13
    $region12: #{tpu_custom_call.1} parent=1 // pred_region
      %35 = dma.done [#allocation9], 128
    $region13: #{tpu_custom_call.1} parent=1 // pred_fallthru
      _
    // Predicated region
    $region14: #{tpu_custom_call.1} parent=1 // pred_check
      _
    $region15: #{tpu_custom_call.1} parent=1 // pred_check_branch
      %37 = sbr.rel (0) target = $region17
    $region16: #{tpu_custom_call.1} parent=1 // pred_region
      %39 = dma.done [#allocation12], 128
    $region17: #{tpu_custom_call.1} parent=1 // pred_fallthru
      _
    %p40 = scmp.eq.s32.totalorder 0, 0
    // Predicated region
    $region18: #{tpu_custom_call.1} parent=1 // pred_check
      %p41 = pneg %p40
    $region19: #{tpu_custom_call.1} parent=1 // pred_check_branch
      %43 = sbr.rel (%p41) target = $region21
    $region20: #{tpu_custom_call.1} parent=1 // pred_region
      %vm44 = vcmask 7168
      %45 = vst.msk [vmem:[#allocation2] sm:$0xff] %vm44, 0.0
      %46 = vst.msk [vmem:[#allocation3] sm:$0xff] %vm44, 0.0
      %47 = vst.msk [vmem:[#allocation4] sm:$0xff] %vm44, 0.0
      %48 = vst.msk [vmem:[#allocation5] sm:$0xff] %vm44, 0.0
      %49 = vst.msk [vmem:[#allocation6] sm:$0xff] %vm44, 0.0
      %50 = vst.msk [vmem:[#allocation7] sm:$0xff] %vm44, 0.0
    $region21: #{tpu_custom_call.1} parent=1 // pred_fallthru
      _
    %v51 = vld [vmem:[#allocation8] sm:$0xff]
    %v52 = vld [vmem:[#allocation11] sm:$0xff]
    %v53 = vlaneseq
    %v54 = vshrl.u32 %v53, 7
    %s55 = smul.u32 0, 8
    %v56 = vstv %s55
    %v57 = vadd.s32 %v54, %v56
    %vm58 = vcmp.lt.s32.totalorder %v57, 8
    %v59 = vlaneseq
    %v60 = vand.u32 %v59, 127
    %s61 = smul.u32 0, 32
    %v62 = vstv %s61
    %v63 = vadd.s32 %v60, %v62
    %vm64 = vcmp.lt.s32.totalorder %v63, 32
    %v65 = vsel %vm58, 1, 0
    %vm66 = vcmp.eq.s32.totalorder %v65, 1
    %vm67 = vmand %vm66, %vm64
    %v68 = vsel %vm67, %v51, 0.0
    %v69 = vsel %vm67, %v52, 0.0
    %v70 = vsub.f32 %v68, %v69
    %v71 = vld [vmem:[#allocation5] sm:$0xff]
    %v72 = vmul.f32 %v70, %v70
    %vm73 = vcmask 261120
    %v74 = vsel %vm73, %v72, 0.0
    %75 = vadd.xlane.f32.xlu0 %v74
    %v76 = vpop.xlane.xlu0 %75
    %v77 = vadd.f32 %v71, %v76
    %vm78 = vcmask 7168
    %79 = vst.msk [vmem:[#allocation5] sm:$0xff] %vm78, %v77
    %81 = vrot.lane.b32.xlu0 %v68, 1
    %v82 = vpop.permute.xlu0 %81
    %v84 = vsub.f32 %v68, %v82
    %86 = vrot.lane.b32.xlu0 %v69, 1
    %v87 = vpop.permute.xlu0 %86
    %v89 = vsub.f32 %v69, %v87
    %vm90 = vcmp.lt.s32.totalorder %v63, 31
    %vm91 = vmand %vm66, %vm90
    %v92 = vsel %vm91, 1, 0
    %v93 = vcvt.s32.f32 %v92
    %95 = vrot.lane.b32.xlu0 %v93, 1
    %v96 = vpop.permute.xlu0 %95
    %v98 = vmul.f32 %v84, %v96
    %v99 = vmul.f32 %v89, %v96
    %v100 = vld [vmem:[#allocation2] sm:$0xff]
    %v101 = vmul.f32 %v98, %v99
    %103 = vrot.lane.b32.xlu0 %v101, 127
    %v104 = vpop.permute.xlu0 %103
    %vm106 = vcmask 252928
    %v107 = vsel %vm106, %v104, 0.0
    %108 = vadd.xlane.f32.xlu0 %v107
    %v109 = vpop.xlane.xlu0 %108
    %v110 = vadd.f32 %v100, %v109
    %111 = vst.msk [vmem:[#allocation2] sm:$0xff] %vm78, %v110
    %v112 = vld [vmem:[#allocation3] sm:$0xff]
    %v113 = vmul.f32 %v98, %v98
    %115 = vrot.lane.b32.xlu0 %v113, 127
    %v116 = vpop.permute.xlu0 %115
    %v118 = vsel %vm106, %v116, 0.0
    %119 = vadd.xlane.f32.xlu0 %v118
    %v120 = vpop.xlane.xlu0 %119
    %v121 = vadd.f32 %v112, %v120
    %122 = vst.msk [vmem:[#allocation3] sm:$0xff] %vm78, %v121
    %v123 = vld [vmem:[#allocation4] sm:$0xff]
    %v124 = vmul.f32 %v99, %v99
    %126 = vrot.lane.b32.xlu0 %v124, 127
    %v127 = vpop.permute.xlu0 %126
    %v129 = vsel %vm106, %v127, 0.0
    %130 = vadd.xlane.f32.xlu0 %v129
    %v131 = vpop.xlane.xlu0 %130
    %v132 = vadd.f32 %v123, %v131
    %133 = vst.msk [vmem:[#allocation4] sm:$0xff] %vm78, %v132
    // Predicated region
    $region22: #{tpu_custom_call.1} parent=1 // pred_check
      %p134 = pneg %p40
    $region23: #{tpu_custom_call.1} parent=1 // pred_check_branch
      %136 = sbr.rel (%p134) target = $region25
    $region24: #{tpu_custom_call.1} parent=1 // pred_region
      %v137 = vld [vmem:[#allocation3] sm:$0xff]
      %v138 = vrsqrt.pop %v137
      %v139 = vmul.f32 %v138, %v137
      %v140 = vmul.f32 %v139, %v138
      %v141 = vmul.f32 0.5, %v140
      %v142 = vsub.f32 1.5, %v141
      %v143 = vmul.f32 %v138, %v142
      %v144 = vmul.f32 %v137, %v143
      %vm145 = vcmp.eq.f32.partialorder %v137, inf
      %v146 = vsel %vm145, %v137, %v144
      %vm147 = vcmp.eq.f32.partialorder %v137, 0.0
      %v148 = vand.u32 %v137, 2147483648
      %v149 = vsel %vm147, %v148, %v146
      %v150 = vmax.f32 %v149, 1e-08
      %v151 = vld [vmem:[#allocation4] sm:$0xff]
      %v152 = vrsqrt.pop %v151
      %v153 = vmul.f32 %v152, %v151
      %v154 = vmul.f32 %v153, %v152
      %v155 = vmul.f32 0.5, %v154
      %v156 = vsub.f32 1.5, %v155
      %v157 = vmul.f32 %v152, %v156
      %v158 = vmul.f32 %v151, %v157
      %vm159 = vcmp.eq.f32.partialorder %v151, inf
      %v160 = vsel %vm159, %v151, %v158
      %vm161 = vcmp.eq.f32.partialorder %v151, 0.0
      %v162 = vand.u32 %v151, 2147483648
      %v163 = vsel %vm161, %v162, %v160
      %v164 = vmax.f32 %v163, 1e-08
      %v165 = vmul.f32 %v150, %v164
      %v166 = vld [vmem:[#allocation2] sm:$0xff]
      %v167 = vrcp.pop %v165
      %v168 = vmul.f32 %v165, %v167
      %v169 = vsub.f32 1.0, %v168
      %v170 = vmul.f32 %v167, %v169
      %v171 = vadd.f32 %v167, %v170
      %vm172 = vweird.f32 %v165
      %vm173 = vweird.f32 %v167
      %vm174 = vmor %vm172, %vm173
      %v175 = vsel %vm174, %v167, %v171
      %v176 = vand.u32 2147483647, %v165
      %vm177 = vcmp.eq.f32.partialorder %v176, 8.507059e+37
      %v178 = vand.u32 %v165, 2147483648
      %v179 = vor.u32 1.1754944e-38, %v178
      %v180 = vsel %vm177, %v179, %v175
      %v181 = vmul.f32 %v166, %v180
      %v182 = vcvt.s32.f32 %v65
      %v183 = vsub.f32 1.0, %v181
      %v184 = vmul.f32 %v183, %v182
      %v185 = vsel %vm78, %v184, 0.0
      %186 = vadd.xlane.f32.xlu0 %v185
      %v187 = vpop.xlane.xlu0 %186
      %v188 = vrot.slane %v187, 4
      %v189 = vadd.f32 %v187, %v188
      %v190 = vrot.slane %v189, 2
      %v191 = vadd.f32 %v189, %v190
      %v192 = vrot.slane %v191, 1
      %v193 = vadd.f32 %v191, %v192
      %s194 = vtos %v193
      %v195 = vld [vmem:[#allocation5] sm:$0xff]
      %v196 = vsel %vm78, %v195, 0.0
      %197 = vadd.xlane.f32.xlu0 %v196
      %v198 = vpop.xlane.xlu0 %197
      %v199 = vrot.slane %v198, 4
      %v200 = vadd.f32 %v198, %v199
      %v201 = vrot.slane %v200, 2
      %v202 = vadd.f32 %v200, %v201
      %v203 = vrot.slane %v202, 1
      %v204 = vadd.f32 %v202, %v203
      %s205 = vtos %v204
      %vm206 = vcmp.eq.s32.totalorder %v54, 0
      %vm207 = vcmp.eq.s32.totalorder %v60, 0
      %vm208 = vmand %vm206, %vm207
      %vm209 = vcmp.eq.s32.totalorder %v60, 1
      %vm210 = vmand %vm206, %vm209
      %v211 = vstv %s194
      %v212 = vsel %vm210, %v211, 0.0
      %v213 = vstv %s205
      %v214 = vsel %vm208, %v213, %v212
      %215 = vst [vmem:[#allocation13] sm:$0xff] %v214
    $region25: #{tpu_custom_call.1} parent=1 // pred_fallthru
      _
    // Predicated region
    $region26: #{tpu_custom_call.1} parent=1 // pred_check
      _
    $region27: #{tpu_custom_call.1} parent=1 // pred_check_branch
      %217 = sbr.rel (0) target = $region29
    $region28: #{tpu_custom_call.1} parent=1 // pred_region
      %219 = vsyncadd [#allocation10], 0
      %s221 = sshll.u32 [#allocation13], 4
      %s222 = int_to_ptr.vmem [resolvable:$true] %s221
      %s223 = sshll.u32 %s2, 4
      %s224 = int_to_ptr.hbm [resolvable:$true] %s223
      %226 = dma.vmem_to_hbm [thread:$0]  %s222, 128, %s224, [#allocation10]
    $region29: #{tpu_custom_call.1} parent=1 // pred_fallthru
      _
    // Predicated region
    $region30: #{tpu_custom_call.1} parent=1 // pred_check
      _
    $region31: #{tpu_custom_call.1} parent=1 // pred_check_branch
      %228 = sbr.rel (0) target = $region33
    $region32: #{tpu_custom_call.1} parent=1 // pred_region
      %230 = dma.done [#allocation10], 128
    $region33: #{tpu_custom_call.1} parent=1 // pred_fallthru
      _
    %231 = vsyncpa [#allocation9], 1
    %232 = vsyncpa [#allocation12], 1
    %233 = vsyncpa [#allocation10], 1

</llo_original>
